<compile_context>
chip_gen: v7x
topology: tpu7x:2x2x1
jax: 0.10.0
libtpu: 0.0.40
codegen_flags: <defaults>
</compile_context>

<pallas_src>
import jax
import jax.numpy as jnp
from jax.experimental import pallas as pl
from jax.experimental.pallas import tpu as pltpu


def _round_up(x, m):
    return (x + m - 1) // m * m


def gaussian_mlp_kernel(x_ref, w1_ref, b1_ref, w2_ref, b2_ref, o_ref):
    # Layer 1: (TB, in_pad) @ (in_pad, hid_pad) on the MXU, f32 accumulation.
    h = jnp.dot(x_ref[...], w1_ref[...], preferred_element_type=jnp.float32)
    h = jnp.maximum(h + b1_ref[...], 0.0)              # bias + ReLU in f32 (VPU)
    # Fused heads: (TB, hid_pad) @ (hid_pad, 2*out_pad) -> [ mu | logvar ].
    o = jnp.dot(h.astype(w2_ref.dtype), w2_ref[...],
                preferred_element_type=jnp.float32)
    o_ref[...] = (o + b2_ref[...]).astype(o_ref.dtype)


def gaussian_mlp_forward(x, w1, b1, w_mu, b_mu, w_lv, b_lv,
                         *, block_b=256, use_bf16=True,
                         training=False, key=None):
    """Forward pass of Gaussian_MLP.

    x: [B, in_dim]; w1: [in_dim, hidden]; b1: [hidden];
    w_mu / w_lv: [hidden, out_dim]; b_mu / b_lv: [out_dim].

    Eval mode (training=False): returns (mu, mu, logvar), matching the PyTorch
    module. Training mode: returns (z, mu, logvar) with z = mu + eps*exp(0.5*logvar).
    """
    B, in_dim = x.shape
    hidden = w1.shape[1]
    out_dim = w_mu.shape[1]

    # ---- pad to hardware-friendly sizes (lanes = 128, sublanes = 8) ---------
    in_pad = _round_up(in_dim, 128)
    hid_pad = _round_up(hidden, 128)
    out_pad = _round_up(out_dim, 128)

    TB = min(block_b, _round_up(B, 8))      # batch tile (multiple of 8)
    B_pad = _round_up(B, TB)

    mm_dtype = jnp.bfloat16 if use_bf16 else jnp.float32

    xp = jnp.zeros((B_pad, in_pad), mm_dtype).at[:B, :in_dim].set(x.astype(mm_dtype))
    w1p = jnp.zeros((in_pad, hid_pad), mm_dtype).at[:in_dim, :hidden].set(
        w1.astype(mm_dtype))
    b1p = jnp.zeros((1, hid_pad), jnp.float32).at[0, :hidden].set(
        b1.astype(jnp.float32))

    # Fuse both heads into one lane-dense matmul: columns [0:out_pad)=mu head,
    # [out_pad:2*out_pad)=logvar head (zero-padded).
    w2p = jnp.zeros((hid_pad, 2 * out_pad), mm_dtype)
    w2p = w2p.at[:hidden, :out_dim].set(w_mu.astype(mm_dtype))
    w2p = w2p.at[:hidden, out_pad:out_pad + out_dim].set(w_lv.astype(mm_dtype))
    b2p = jnp.zeros((1, 2 * out_pad), jnp.float32)
    b2p = b2p.at[0, :out_dim].set(b_mu.astype(jnp.float32))
    b2p = b2p.at[0, out_pad:out_pad + out_dim].set(b_lv.astype(jnp.float32))

    grid = (B_pad // TB,)

    itemsize = jnp.dtype(mm_dtype).itemsize
    flops = 2 * B_pad * (in_pad * hid_pad + hid_pad * 2 * out_pad)
    bytes_accessed = (xp.size * itemsize + w1p.size * itemsize + w2p.size * itemsize
                      + b1p.size * 4 + b2p.size * 4 + B_pad * 2 * out_pad * 4)

    out = pl.pallas_call(
        gaussian_mlp_kernel,
        out_shape=jax.ShapeDtypeStruct((B_pad, 2 * out_pad), jnp.float32),
        grid_spec=pltpu.PrefetchScalarGridSpec(
            num_scalar_prefetch=0,
            grid=grid,
            in_specs=[
                pl.BlockSpec((TB, in_pad), lambda i: (i, 0)),            # x (batch-tiled)
                pl.BlockSpec((in_pad, hid_pad), lambda i: (0, 0)),       # W1 (resident)
                pl.BlockSpec((1, hid_pad), lambda i: (0, 0)),            # b1 (resident)
                pl.BlockSpec((hid_pad, 2 * out_pad), lambda i: (0, 0)),  # [W_mu|W_lv]
                pl.BlockSpec((1, 2 * out_pad), lambda i: (0, 0)),        # [b_mu|b_lv]
            ],
            out_specs=pl.BlockSpec((TB, 2 * out_pad), lambda i: (i, 0)),
        ),
        compiler_params=pltpu.CompilerParams(
            dimension_semantics=("parallel",)),   # v7x: shard batch over 2 TCs
        cost_estimate=pl.CostEstimate(
            flops=flops, transcendentals=0, bytes_accessed=bytes_accessed),
    )(xp, w1p, b1p, w2p, b2p)

    mu = out[:B, :out_dim]
    logvar = out[:B, out_pad:out_pad + out_dim]

    if training:
        # Reparameterization trick (done outside the kernel; needs per-call RNG).
        eps = jax.random.normal(key, logvar.shape, logvar.dtype)
        z = mu + eps * jnp.exp(0.5 * logvar)
        return z, mu, logvar
    return mu, mu, logvar


def init_linear_params(key, in_features, out_features, dtype=jnp.float32):
    """Mimics nn.Linear default init (uniform +/- 1/sqrt(fan_in)); weight is
    returned already transposed to [in_features, out_features]."""
    kw, kb = jax.random.split(key)
    bound = 1.0 / (in_features ** 0.5)
    w = jax.random.uniform(kw, (in_features, out_features), dtype,
                           minval=-bound, maxval=bound)
    b = jax.random.uniform(kb, (out_features,), dtype,
                           minval=-bound, maxval=bound)
    return w, b


if __name__ == "__main__":
    # Small shapes consistent with Gaussian_MLP(in_dim=32, out_dim=16, hidden_dim=128)
    B, in_dim, hidden_dim, out_dim = 8, 32, 128, 16

    key = jax.random.PRNGKey(0)
    kx, k1, k2, k3 = jax.random.split(key, 4)

    x = jax.random.normal(kx, (B, in_dim), jnp.float32)
    w1, b1 = init_linear_params(k1, in_dim, hidden_dim)
    w_mu, b_mu = init_linear_params(k2, hidden_dim, out_dim)
    w_lv, b_lv = init_linear_params(k3, hidden_dim, out_dim)

    # Eval-mode forward: (mu, mu, logvar)
    z, mu, logvar = gaussian_mlp_forward(x, w1, b1, w_mu, b_mu, w_lv, b_lv)
    z, mu, logvar = jax.block_until_ready((z, mu, logvar))

    # Pure-JAX f32 reference
    h_ref = jnp.maximum(x @ w1 + b1, 0.0)
    mu_ref = h_ref @ w_mu + b_mu
    lv_ref = h_ref @ w_lv + b_lv

    assert mu.shape == (B, out_dim) and logvar.shape == (B, out_dim)
    # bf16 matmul operands -> loose tolerance vs the f32 reference.
    assert jnp.allclose(mu, mu_ref, atol=5e-2, rtol=5e-2)
    assert jnp.allclose(logvar, lv_ref, atol=5e-2, rtol=5e-2)
    assert jnp.allclose(z, mu)   # eval mode returns (mu, mu, logvar)

    print("KERNEL_OK")
</pallas_src>

<mosaic_0001>
module attributes {stable_mosaic.version = 11 : i64} {
  func.func @gaussian_mlp_kernel(%arg0: i32, %arg1: memref<8x128xbf16, #tpu.memory_space<vmem>>, %arg2: memref<128x128xbf16, #tpu.memory_space<vmem>>, %arg3: memref<1x128xf32, #tpu.memory_space<vmem>>, %arg4: memref<128x256xbf16, #tpu.memory_space<vmem>>, %arg5: memref<1x256xf32, #tpu.memory_space<vmem>>, %arg6: memref<8x256xf32, #tpu.memory_space<vmem>>) attributes {dimension_semantics = [#tpu.dimension_semantics<parallel>], iteration_bounds = array<i64: 1>, scalar_prefetch = 0 : i64, scratch_operands = 0 : i64, tpu.core_type = #tpu.core_type<tc>, window_params = [{transform_indices = @transform_0, window_bounds = array<i64: 8, 128>}, {pipeline_mode = #tpu.pipeline_mode<synchronous>, transform_indices = @transform_1, window_bounds = array<i64: 128, 128>}, {pipeline_mode = #tpu.pipeline_mode<synchronous>, transform_indices = @transform_2, window_bounds = array<i64: 1, 128>}, {pipeline_mode = #tpu.pipeline_mode<synchronous>, transform_indices = @transform_3, window_bounds = array<i64: 128, 256>}, {pipeline_mode = #tpu.pipeline_mode<synchronous>, transform_indices = @transform_4, window_bounds = array<i64: 1, 256>}, {transform_indices = @transform_5, window_bounds = array<i64: 8, 256>}]} {
    %c0 = arith.constant 0 : index
    %c0_0 = arith.constant 0 : index
    %0 = vector.load %arg1[%c0, %c0_0] : memref<8x128xbf16, #tpu.memory_space<vmem>>, vector<8x128xbf16>
    %c0_1 = arith.constant 0 : index
    %c0_2 = arith.constant 0 : index
    %1 = vector.load %arg2[%c0_1, %c0_2] : memref<128x128xbf16, #tpu.memory_space<vmem>>, vector<128x128xbf16>
    %cst = arith.constant dense<0.000000e+00> : vector<8x128xf32>
    %2 = tpu.matmul %0, %1, %cst {dimension_numbers = #tpu.dot_dimension_numbers<[1], [0], [0], [1], [0, 0, 1, 1], [], []>} : vector<8x128xbf16>, vector<128x128xbf16>, vector<8x128xf32> -> vector<8x128xf32>
    %c0_3 = arith.constant 0 : index
    %c0_4 = arith.constant 0 : index
    %3 = vector.load %arg3[%c0_3, %c0_4] : memref<1x128xf32, #tpu.memory_space<vmem>>, vector<1x128xf32>
    %4 = vector.broadcast %3 : vector<1x128xf32> to vector<8x128xf32>
    %5 = arith.addf %2, %4 : vector<8x128xf32>
    %cst_5 = arith.constant 0.000000e+00 : f32
    %6 = vector.broadcast %cst_5 : f32 to vector<8x128xf32>
    %7 = arith.maximumf %5, %6 : vector<8x128xf32>
    %8 = arith.truncf %7 : vector<8x128xf32> to vector<8x128xbf16>
    %c0_6 = arith.constant 0 : index
    %c0_7 = arith.constant 0 : index
    %9 = vector.load %arg4[%c0_6, %c0_7] : memref<128x256xbf16, #tpu.memory_space<vmem>>, vector<128x256xbf16>
    %cst_8 = arith.constant dense<0.000000e+00> : vector<8x256xf32>
    %10 = tpu.matmul %8, %9, %cst_8 {dimension_numbers = #tpu.dot_dimension_numbers<[1], [0], [0], [1], [0, 0, 1, 1], [], []>} : vector<8x128xbf16>, vector<128x256xbf16>, vector<8x256xf32> -> vector<8x256xf32>
    %c0_9 = arith.constant 0 : index
    %c0_10 = arith.constant 0 : index
    %11 = vector.load %arg5[%c0_9, %c0_10] : memref<1x256xf32, #tpu.memory_space<vmem>>, vector<1x256xf32>
    %12 = vector.broadcast %11 : vector<1x256xf32> to vector<8x256xf32>
    %13 = arith.addf %10, %12 : vector<8x256xf32>
    %c0_11 = arith.constant 0 : index
    %c0_12 = arith.constant 0 : index
    %14 = vector.load %arg6[%c0_11, %c0_12] : memref<8x256xf32, #tpu.memory_space<vmem>>, vector<8x256xf32>
    tpu.vector_store %arg6[%c0_11, %c0_12], %13 {strides = array<i32>} : memref<8x256xf32, #tpu.memory_space<vmem>>, vector<8x256xf32>,
    return
  }
  func.func @transform_0(%arg0: i32) -> (i32, i32) {
    %c0_i32 = arith.constant 0 : i32
    %c0_i32_0 = arith.constant 0 : i32
    return %arg0, %c0_i32 : i32, i32
  }
  func.func @transform_1(%arg0: i32) -> (i32, i32) {
    %c0_i32 = arith.constant 0 : i32
    %c0_i32_0 = arith.constant 0 : i32
    %c0_i32_1 = arith.constant 0 : i32
    return %c0_i32, %c0_i32_0 : i32, i32
  }
  func.func @transform_2(%arg0: i32) -> (i32, i32) {
    %c0_i32 = arith.constant 0 : i32
    %c0_i32_0 = arith.constant 0 : i32
    %c0_i32_1 = arith.constant 0 : i32
    return %c0_i32, %c0_i32_0 : i32, i32
  }
  func.func @transform_3(%arg0: i32) -> (i32, i32) {
    %c0_i32 = arith.constant 0 : i32
    %c0_i32_0 = arith.constant 0 : i32
    %c0_i32_1 = arith.constant 0 : i32
    return %c0_i32, %c0_i32_0 : i32, i32
  }
  func.func @transform_4(%arg0: i32) -> (i32, i32) {
    %c0_i32 = arith.constant 0 : i32
    %c0_i32_0 = arith.constant 0 : i32
    %c0_i32_1 = arith.constant 0 : i32
    return %c0_i32, %c0_i32_0 : i32, i32
  }
  func.func @transform_5(%arg0: i32) -> (i32, i32) {
    %c0_i32 = arith.constant 0 : i32
    %c0_i32_0 = arith.constant 0 : i32
    return %arg0, %c0_i32 : i32, i32
  }
}

</mosaic_0001>

<llo_original>
// kernel: tpu_custom_call.1
$region0: #{tpu_custom_call.1}
  #allocation0 [shape = 'u32[]', space=smem, size = 0x4, offset = 0x4, fixed_abs, tag = 'smem constant byte address 0x4 - core index']
  #allocation1 [shape = 'u32[144,128]{1,0:T(1,128)}', space=vmem, size = 0x12000, scoped, tag = 'internal scratch']
  %s0 = inlined_call_operand.hbm [shape: bf16[8,128], index: 0, kind: input, shape index: {}]
  %s1 = inlined_call_operand.hbm [shape: bf16[128,128], index: 1, kind: input, shape index: {}]
  %s2 = inlined_call_operand.vmem [shape: f32[1,128], index: 2, kind: input, shape index: {}]
  %s3 = inlined_call_operand.hbm [shape: bf16[128,256], index: 3, kind: input, shape index: {}]
  %s4 = inlined_call_operand.vmem [shape: f32[1,256], index: 4, kind: input, shape index: {}]
  %s5 = inlined_call_operand.hbm [shape: f32[8,256], index: 5, kind: output, shape index: {}]
  %s6 = sld [smem:[#allocation0]]
  $region42: #{tpu_custom_call.1} parent=0
    _
  %s8 = ssub.s32 1, %s6
  %s9 = scalar_select 0, %s8, %s6
  $region1: #{tpu_custom_call.1} parent=0
    #allocation2 [shape = 'u8[2048]{0}', space=vmem, size = 0x800, scoped, tag = 'input window, operand 0, single buffered']
    #allocation3 [shape = 's32[1]{0}', space=sflag, size = 0x4, scoped, tag = 'scoped memory for tpu_custom_call.1']
    #allocation4 [shape = 's32[1]{0}', space=sflag, size = 0x4, scoped, tag = 'scoped memory for tpu_custom_call.1']
    #allocation5 [shape = 'u8[32768]{0}', space=vmem, size = 0x8000, scoped, tag = 'input window, operand 1, single buffered']
    #allocation6 [shape = 's32[1]{0}', space=sflag, size = 0x4, scoped, tag = 'scoped memory for tpu_custom_call.1']
    #allocation7 [shape = 'u8[65536]{0}', space=vmem, size = 0x10000, scoped, tag = 'input window, operand 3, single buffered']
    #allocation8 [shape = 'u8[8192]{0}', space=vmem, size = 0x2000, scoped, tag = 'output window, operand 0, single buffered']
    %10 = vsyncpa [#allocation3], 0
    %11 = vsyncpa [#allocation6], 0
    %12 = vsyncpa [#allocation4], 0
    // Predicated region
    $region2: #{tpu_custom_call.1} parent=1 // pred_check
      _
    $region3: #{tpu_custom_call.1} parent=1 // pred_check_branch
      %14 = sbr.rel (0) target = $region5
    $region4: #{tpu_custom_call.1} parent=1 // pred_region
      %s16 = ssub.s32 64, 64
      %17 = vsyncadd [#allocation3], %s16
      %s19 = sshll.u32 [#allocation2], 4
      %s20 = int_to_ptr.vmem [resolvable:$true] %s19
      %22 = dma.hbm_to_vmem [thread:$0]  %s0, 64, %s20, [#allocation3]
    $region5: #{tpu_custom_call.1} parent=1 // pred_fallthru
      _
    // Predicated region
    $region6: #{tpu_custom_call.1} parent=1 // pred_check
      _
    $region7: #{tpu_custom_call.1} parent=1 // pred_check_branch
      %24 = sbr.rel (0) target = $region9
    $region8: #{tpu_custom_call.1} parent=1 // pred_region
      %s26 = ssub.s32 1024, 1024
      %27 = vsyncadd [#allocation6], %s26
      %s28 = sshll.u32 [#allocation5], 4
      %s29 = int_to_ptr.vmem [resolvable:$true] %s28
      %34 = dma.hbm_to_vmem [thread:$0]  %s1, 1024, %s29, [#allocation6], 64, 64, 4
    $region9: #{tpu_custom_call.1} parent=1 // pred_fallthru
      _
    // Predicated region
    $region10: #{tpu_custom_call.1} parent=1 // pred_check
      _
    $region11: #{tpu_custom_call.1} parent=1 // pred_check_branch
      %36 = sbr.rel (0) target = $region13
    $region12: #{tpu_custom_call.1} parent=1 // pred_region
      _
    $region13: #{tpu_custom_call.1} parent=1 // pred_fallthru
      _
    // Predicated region
    $region14: #{tpu_custom_call.1} parent=1 // pred_check
      _
    $region15: #{tpu_custom_call.1} parent=1 // pred_check_branch
      %38 = sbr.rel (0) target = $region17
    $region16: #{tpu_custom_call.1} parent=1 // pred_region
      %s40 = ssub.s32 2048, 2048
      %41 = vsyncadd [#allocation6], %s40
      %s42 = sshll.u32 [#allocation7], 4
      %s43 = int_to_ptr.vmem [resolvable:$true] %s42
      %48 = dma.hbm_to_vmem [thread:$0]  %s3, 2048, %s43, [#allocation6], 128, 128, 8
    $region17: #{tpu_custom_call.1} parent=1 // pred_fallthru
      _
    // Predicated region
    $region18: #{tpu_custom_call.1} parent=1 // pred_check
      _
    $region19: #{tpu_custom_call.1} parent=1 // pred_check_branch
      %50 = sbr.rel (0) target = $region21
    $region20: #{tpu_custom_call.1} parent=1 // pred_region
      _
    $region21: #{tpu_custom_call.1} parent=1 // pred_fallthru
      _
    // Predicated region
    $region22: #{tpu_custom_call.1} parent=1 // pred_check
      _
    $region23: #{tpu_custom_call.1} parent=1 // pred_check_branch
      %52 = sbr.rel (0) target = $region25
    $region24: #{tpu_custom_call.1} parent=1 // pred_region
      %53 = dma.done [#allocation3], 64
    $region25: #{tpu_custom_call.1} parent=1 // pred_fallthru
      _
    // Predicated region
    $region26: #{tpu_custom_call.1} parent=1 // pred_check
      _
    $region27: #{tpu_custom_call.1} parent=1 // pred_check_branch
      %55 = sbr.rel (0) target = $region29
    $region28: #{tpu_custom_call.1} parent=1 // pred_region
      %56 = dma.done [#allocation6], 1024
    $region29: #{tpu_custom_call.1} parent=1 // pred_fallthru
      _
    // Predicated region
    $region30: #{tpu_custom_call.1} parent=1 // pred_check
      _
    $region31: #{tpu_custom_call.1} parent=1 // pred_check_branch
      %58 = sbr.rel (0) target = $region33
    $region32: #{tpu_custom_call.1} parent=1 // pred_region
      %59 = dma.done [#allocation6], 2048
    $region33: #{tpu_custom_call.1} parent=1 // pred_fallthru
      _
    %v61 = vld [vmem:[#allocation2] sm:$0xf]
    %v62 = vld [vmem:[#allocation5] sm:$0xf]
    %v63 = vld [vmem:[#allocation5 + $0x4] sm:$0xf]
    %v64 = vld [vmem:[#allocation5 + $0x8] sm:$0xf]
    %v65 = vld [vmem:[#allocation5 + $0xc] sm:$0xf]
    %v66 = vld [vmem:[#allocation5 + $0x10] sm:$0xf]
    %v67 = vld [vmem:[#allocation5 + $0x14] sm:$0xf]
    %v68 = vld [vmem:[#allocation5 + $0x18] sm:$0xf]
    %v69 = vld [vmem:[#allocation5 + $0x1c] sm:$0xf]
    %v70 = vld [vmem:[#allocation5 + $0x20] sm:$0xf]
    %v71 = vld [vmem:[#allocation5 + $0x24] sm:$0xf]
    %v72 = vld [vmem:[#allocation5 + $0x28] sm:$0xf]
    %v73 = vld [vmem:[#allocation5 + $0x2c] sm:$0xf]
    %v74 = vld [vmem:[#allocation5 + $0x30] sm:$0xf]
    %v75 = vld [vmem:[#allocation5 + $0x34] sm:$0xf]
    %v76 = vld [vmem:[#allocation5 + $0x38] sm:$0xf]
    %v77 = vld [vmem:[#allocation5 + $0x3c] sm:$0xf]
    %v78 = vld [vmem:[%s2] sm:$0x1]
    %v80 = vlaneseq
    %v81 = vshrl.u32 %v80, 7
    %v82 = vsub.s32 0, %v81
    %v83 = vrot.slane %v78, %v82
    %v101 = vunpack.c.l.b16 %v62
    %v102 = vunpack.c.l.b16 %v63
    %v103 = vunpack.c.l.b16 %v64
    %v104 = vunpack.c.l.b16 %v65
    %v105 = vunpack.c.l.b16 %v66
    %v106 = vunpack.c.l.b16 %v67
    %v107 = vunpack.c.l.b16 %v68
    %v108 = vunpack.c.l.b16 %v69
    %v109 = vunpack.c.l.b16 %v70
    %v110 = vunpack.c.l.b16 %v71
    %v111 = vunpack.c.l.b16 %v72
    %v112 = vunpack.c.l.b16 %v73
    %v113 = vunpack.c.l.b16 %v74
    %v114 = vunpack.c.l.b16 %v75
    %v115 = vunpack.c.l.b16 %v76
    %v116 = vunpack.c.l.b16 %v77
    %v117 = vpack.c.b16 %v102, %v101
    %v118 = vpack.c.b16 %v104, %v103
    %v119 = vpack.c.b16 %v106, %v105
    %v120 = vpack.c.b16 %v108, %v107
    %v121 = vpack.c.b16 %v110, %v109
    %v122 = vpack.c.b16 %v112, %v111
    %v123 = vpack.c.b16 %v114, %v113
    %v124 = vpack.c.b16 %v116, %v115
    %133 = vmatprep.subr.bf16.mxu0 0
    %134 = vmatpush1.bf16.msra.mxu0 %v117
    %135 = vmatprep.subr.bf16.mxu0 0
    %136 = vmatpush1.bf16.msra.mxu0 %v118
    %137 = vmatprep.subr.bf16.mxu0 0
    %138 = vmatpush1.bf16.msra.mxu0 %v119
    %139 = vmatprep.subr.bf16.mxu0 0
    %140 = vmatpush1.bf16.msra.mxu0 %v120
    %141 = vmatprep.subr.bf16.mxu0 0
    %142 = vmatpush1.bf16.msra.mxu0 %v121
    %143 = vmatprep.subr.bf16.mxu0 0
    %144 = vmatpush1.bf16.msra.mxu0 %v122
    %145 = vmatprep.subr.bf16.mxu0 0
    %146 = vmatpush1.bf16.msra.mxu0 %v123
    %147 = vmatprep.subr.bf16.mxu0 0
    %148 = vmatpush1.bf16.msra.mxu0 %v124
    %149 = vmatprep.subr.bf16.mxu0 0
    %150 = vmatpush1.bf16.msra.mxu0 0
    %151 = vmatprep.subr.bf16.mxu0 0
    %152 = vmatpush1.bf16.msra.mxu0 0
    %153 = vmatprep.subr.bf16.mxu0 0
    %154 = vmatpush1.bf16.msra.mxu0 0
    %155 = vmatprep.subr.bf16.mxu0 0
    %156 = vmatpush1.bf16.msra.mxu0 0
    %157 = vmatprep.subr.bf16.mxu0 0
    %158 = vmatpush1.bf16.msra.mxu0 0
    %159 = vmatprep.subr.bf16.mxu0 0
    %160 = vmatpush1.bf16.msra.mxu0 0
    %161 = vmatprep.subr.bf16.mxu0 0
    %162 = vmatpush1.bf16.msra.mxu0 0
    %163 = vmatprep.subr.bf16.mxu0 0
    %164 = vmatpush1.bf16.msra.mxu0 0
    %165 = vmatprep.mubr.bf16.mxu0 0
    %166 = vmatmul.mubr.bf16.gmra.mrb[0].mxu0 %v61
    %v167 = vpop.f32.mrb[0].mxu0
    %v168 = vadd.f32 %v83, %v167
    %v169 = vpop.f32.mrb[0].mxu0
    %v170 = vpop.f32.mrb[0].mxu0
    %v171 = vpop.f32.mrb[0].mxu0
    %172 = vdwg.mxu0
    %v173 = vmax.f32 %v168, 0.0
    %v174 = vpack.c.bf16 %v173, %v173
    %v175 = vld [vmem:[#allocation7] sm:$0xff]
    %v176 = vld [vmem:[#allocation7 + $0x8] sm:$0xff]
    %v177 = vld [vmem:[#allocation7 + $0x10] sm:$0xff]
    %v178 = vld [vmem:[#allocation7 + $0x18] sm:$0xff]
    %v179 = vld [vmem:[#allocation7 + $0x20] sm:$0xff]
    %v180 = vld [vmem:[#allocation7 + $0x28] sm:$0xff]
    %v181 = vld [vmem:[#allocation7 + $0x30] sm:$0xff]
    %v182 = vld [vmem:[#allocation7 + $0x38] sm:$0xff]
    %v183 = vld [vmem:[#allocation7 + $0x40] sm:$0xff]
    %v184 = vld [vmem:[#allocation7 + $0x48] sm:$0xff]
    %v185 = vld [vmem:[#allocation7 + $0x50] sm:$0xff]
    %v186 = vld [vmem:[#allocation7 + $0x58] sm:$0xff]
    %v187 = vld [vmem:[#allocation7 + $0x60] sm:$0xff]
    %v188 = vld [vmem:[#allocation7 + $0x68] sm:$0xff]
    %v189 = vld [vmem:[#allocation7 + $0x70] sm:$0xff]
    %v190 = vld [vmem:[#allocation7 + $0x78] sm:$0xff]
    %v191 = vld [vmem:[%s4] sm:$0x3]
    %v193 = vlaneseq
    %v194 = vshrl.u32 %v193, 7
    %v195 = vsub.s32 0, %v194
    %v196 = vrot.slane %v191, %v195
    %v197 = vlaneseq
    %v198 = vshrl.u32 %v197, 7
    %v199 = vsub.s32 1, %v198
    %v200 = vrot.slane %v191, %v199
    %v219 = vunpack.c.l.b16 %v175
    %v220 = vunpack.c.h.b16 %v175
    %v221 = vunpack.c.l.b16 %v176
    %v222 = vunpack.c.h.b16 %v176
    %v223 = vunpack.c.l.b16 %v177
    %v224 = vunpack.c.h.b16 %v177
    %v225 = vunpack.c.l.b16 %v178
    %v226 = vunpack.c.h.b16 %v178
    %v227 = vunpack.c.l.b16 %v179
    %v228 = vunpack.c.h.b16 %v179
    %v229 = vunpack.c.l.b16 %v180
    %v230 = vunpack.c.h.b16 %v180
    %v231 = vunpack.c.l.b16 %v181
    %v232 = vunpack.c.h.b16 %v181
    %v233 = vunpack.c.l.b16 %v182
    %v234 = vunpack.c.h.b16 %v182
    %v235 = vunpack.c.l.b16 %v183
    %v236 = vunpack.c.h.b16 %v183
    %v237 = vunpack.c.l.b16 %v184
    %v238 = vunpack.c.h.b16 %v184
    %v239 = vunpack.c.l.b16 %v185
    %v240 = vunpack.c.h.b16 %v185
    %v241 = vunpack.c.l.b16 %v186
    %v242 = vunpack.c.h.b16 %v186
    %v243 = vunpack.c.l.b16 %v187
    %v244 = vunpack.c.h.b16 %v187
    %v245 = vunpack.c.l.b16 %v188
    %v246 = vunpack.c.h.b16 %v188
    %v247 = vunpack.c.l.b16 %v189
    %v248 = vunpack.c.h.b16 %v189
    %v249 = vunpack.c.l.b16 %v190
    %v250 = vunpack.c.h.b16 %v190
    %v251 = vpack.c.b16 %v221, %v219
    %v252 = vpack.c.b16 %v222, %v220
    %v253 = vpack.c.b16 %v225, %v223
    %v254 = vpack.c.b16 %v226, %v224
    %v255 = vpack.c.b16 %v229, %v227
    %v256 = vpack.c.b16 %v230, %v228
    %v257 = vpack.c.b16 %v233, %v231
    %v258 = vpack.c.b16 %v234, %v232
    %v259 = vpack.c.b16 %v237, %v235
    %v260 = vpack.c.b16 %v238, %v236
    %v261 = vpack.c.b16 %v241, %v239
    %v262 = vpack.c.b16 %v242, %v240
    %v263 = vpack.c.b16 %v245, %v243
    %v264 = vpack.c.b16 %v246, %v244
    %v265 = vpack.c.b16 %v249, %v247
    %v266 = vpack.c.b16 %v250, %v248
    %283 = vmatprep.subr.bf16.mxu0 %v252
    %284 = vmatpush1.bf16.msra.mxu0 %v251
    %285 = vmatprep.subr.bf16.mxu0 %v254
    %286 = vmatpush1.bf16.msra.mxu0 %v253
    %287 = vmatprep.subr.bf16.mxu0 %v256
    %288 = vmatpush1.bf16.msra.mxu0 %v255
    %289 = vmatprep.subr.bf16.mxu0 %v258
    %290 = vmatpush1.bf16.msra.mxu0 %v257
    %291 = vmatprep.subr.bf16.mxu0 %v260
    %292 = vmatpush1.bf16.msra.mxu0 %v259
    %293 = vmatprep.subr.bf16.mxu0 %v262
    %294 = vmatpush1.bf16.msra.mxu0 %v261
    %295 = vmatprep.subr.bf16.mxu0 %v264
    %296 = vmatpush1.bf16.msra.mxu0 %v263
    %297 = vmatprep.subr.bf16.mxu0 %v266
    %298 = vmatpush1.bf16.msra.mxu0 %v265
    %299 = vmatprep.subr.bf16.mxu0 0
    %300 = vmatpush1.bf16.msra.mxu0 0
    %301 = vmatprep.subr.bf16.mxu0 0
    %302 = vmatpush1.bf16.msra.mxu0 0
    %303 = vmatprep.subr.bf16.mxu0 0
    %304 = vmatpush1.bf16.msra.mxu0 0
    %305 = vmatprep.subr.bf16.mxu0 0
    %306 = vmatpush1.bf16.msra.mxu0 0
    %307 = vmatprep.subr.bf16.mxu0 0
    %308 = vmatpush1.bf16.msra.mxu0 0
    %309 = vmatprep.subr.bf16.mxu0 0
    %310 = vmatpush1.bf16.msra.mxu0 0
    %311 = vmatprep.subr.bf16.mxu0 0
    %312 = vmatpush1.bf16.msra.mxu0 0
    %313 = vmatprep.subr.bf16.mxu0 0
    %314 = vmatpush1.bf16.msra.mxu0 0
    %315 = vmatprep.mubr.bf16.mxu0 0
    %316 = vmatmul.mubr.bf16.gmra.mrb[0].mxu0 %v174
    %v317 = vpop.f32.mrb[0].mxu0
    %v318 = vadd.f32 %v196, %v317
    %v319 = vpop.f32.mrb[0].mxu0
    %v320 = vadd.f32 %v200, %v319
    %v321 = vpop.f32.mrb[0].mxu0
    %v322 = vpop.f32.mrb[0].mxu0
    %323 = vdwg.mxu0
    %324 = vst [vmem:[#allocation8] sm:$0xff] %v318
    %325 = vst [vmem:[#allocation8 + $0x8] sm:$0xff] %v320
    // Predicated region
    $region34: #{tpu_custom_call.1} parent=1 // pred_check
      _
    $region35: #{tpu_custom_call.1} parent=1 // pred_check_branch
      %327 = sbr.rel (0) target = $region37
    $region36: #{tpu_custom_call.1} parent=1 // pred_region
      %s329 = ssub.s32 256, 256
      %330 = vsyncadd [#allocation4], %s329
      %s332 = sshll.u32 [#allocation8], 4
      %s333 = int_to_ptr.vmem [resolvable:$true] %s332
      %335 = dma.vmem_to_hbm [thread:$0]  %s333, 256, %s5, [#allocation4]
    $region37: #{tpu_custom_call.1} parent=1 // pred_fallthru
      _
    // Predicated region
    $region38: #{tpu_custom_call.1} parent=1 // pred_check
      _
    $region39: #{tpu_custom_call.1} parent=1 // pred_check_branch
      %337 = sbr.rel (0) target = $region41
    $region40: #{tpu_custom_call.1} parent=1 // pred_region
      %338 = dma.done [#allocation4], 256
    $region41: #{tpu_custom_call.1} parent=1 // pred_fallthru
      _
    %339 = vsyncpa [#allocation3], 1
    %340 = vsyncpa [#allocation6], 1
    %341 = vsyncpa [#allocation4], 1

</llo_original>
